<compile_context>
chip_gen: v5e
topology: v5e:2x2
jax: 0.10.0
libtpu: 0.0.40
codegen_flags: <defaults>
</compile_context>

<pallas_src>
import numpy as np
import jax
import jax.numpy as jnp
from jax import lax
from jax.experimental import pallas as pl
from jax.experimental.pallas import tpu as pltpu

# ----------------------------- module config --------------------------------
GATE_CHANNEL = 32          # C
REDUCTION_RATIO = 16
DILATION_CONV_NUM = 2
DILATION_VAL = 4           # dilation == padding == 4

N, C, H, W = 2, GATE_CHANNEL, 16, 16
HW = H * W
CM = GATE_CHANNEL // REDUCTION_RATIO   # reduced channel count (= 2)
R = CM * N                             # folded sublane rows, channel-major (o*N + n)
EPS = 1e-5

# ----------------------- scalar (SMEM) parameter layout ----------------------
# Only BN gamma/beta and the final 1x1 conv (wf, bf) stay as SMEM scalars; all
# conv weight matrices now go to VMEM for the MXU. Pre-BN conv biases are not
# passed at all (cancelled by training-mode BN mean subtraction).
SCALAR_LAYOUT = [("g0", CM), ("be0", CM)]
for _s in range(DILATION_CONV_NUM):
    SCALAR_LAYOUT += [(f"gd{_s}", CM), (f"bed{_s}", CM)]
SCALAR_LAYOUT += [("wf", CM), ("bf", 1)]

OFF = {}
_running = 0
for _name, _sz in SCALAR_LAYOUT:
    OFF[_name] = _running
    _running += _sz
S_TOTAL = _running

# Static tap table for the dilated 3x3 convs (kernel=3, dilation=pad=4):
# (dh, dw, lane-roll shift) realizing win[p] = feat[p + dh*W + dw] (zero outside).
TAPS = []
for _i in range(3):
    _dh = (_i - 1) * DILATION_VAL
    for _j in range(3):
        _dw = (_j - 1) * DILATION_VAL
        TAPS.append((_dh, _dw, (-(_dh * W + _dw)) % HW))


# --------------------------------- kernel -----------------------------------
def spatial_gate_kernel(x_ref, w0_ref, wd0_ref, wd1_ref, s_ref, gate_ref):
    """x_ref:   (N*C, HW) VMEM  -- free view of NCHW input (rows = n*C + c)
       w0_ref:  (R, N*C)  VMEM  -- reduce0 1x1 weights, block-diag over batch
       wd*_ref: (R, 9*R)  VMEM  -- dilated 3x3 weights, tap-major, block-diag over batch
       s_ref:   (S_TOTAL,) SMEM -- BN gamma/beta + final conv (wf, bf)
       gate_ref:(N, HW)   VMEM  -- spatial gate (pre-expand)."""
    inv_cnt = 1.0 / float(N * H * W)

    def bn_relu(feats, g_off, be_off):
        # Training-mode BatchNorm2d (batch stats, biased variance, eps=1e-5) + ReLU.
        # Two-pass variance (mean subtracted first) for numerical robustness.
        rows = []
        for o in range(CM):
            f = feats[o * N:(o + 1) * N]                    # (N, HW) channel-o slab
            mean = jnp.sum(f) * inv_cnt
            d = f - mean
            var = jnp.sum(d * d) * inv_cnt
            scale = s_ref[g_off + o] * lax.rsqrt(var + EPS)
            rows.append(jnp.maximum(d * scale + s_ref[be_off + o], 0.0))
        return jnp.concatenate(rows, axis=0)                # back to (R, HW)

    # ---- gate_s_conv_reduce0: 1x1 conv C -> CM on the MXU (bias folded by BN).
    # feats[o*N + n, p] = sum_c w0[o, c] * x[n*C + c, p]
    feats = jnp.dot(w0_ref[...], x_ref[...], preferred_element_type=jnp.float32)
    feats = bn_relu(feats, OFF["g0"], OFF["be0"])

    # ---- boundary masks for the dilated taps (W = 16 => shifts/ands, no int div).
    pos = lax.broadcasted_iota(jnp.int32, (R, HW), 1)
    row = pos >> 4          # pos // W
    col = pos & (W - 1)     # pos %  W

    def tap_mask(dh, dw):
        conds = []
        if dh > 0:
            conds.append(row < H - dh)
        elif dh < 0:
            conds.append(row >= -dh)
        if dw > 0:
            conds.append(col < W - dw)
        elif dw < 0:
            conds.append(col >= -dw)
        if not conds:
            return None                                     # center tap: all valid
        m = conds[0]
        for c in conds[1:]:
            m = jnp.logical_and(m, c)
        return m

    tap_masks = [tap_mask(dh, dw) for dh, dw, _ in TAPS]

    # ---- dilated 3x3 convs: in-register roll+mask windows (both reduced channels
    # and both images per roll), im2col stack, then a single MXU dot per stage.
    def dilated_stage(feats, wd_ref, g_off, be_off):
        wins = []
        for t, (_, _, sh) in enumerate(TAPS):
            rolled = feats if sh == 0 else pltpu.roll(feats, sh, 1)
            wins.append(rolled if tap_masks[t] is None
                        else jnp.where(tap_masks[t], rolled, 0.0))
        x_col = jnp.concatenate(wins, axis=0)               # (9*R, HW), rows (t, c, n)
        out = jnp.dot(wd_ref[...], x_col, preferred_element_type=jnp.float32)
        return bn_relu(out, g_off, be_off)

    for s_idx, wd_ref in enumerate((wd0_ref, wd1_ref)):
        feats = dilated_stage(feats, wd_ref, OFF[f"gd{s_idx}"], OFF[f"bed{s_idx}"])

    # ---- gate_s_conv_final: 1x1 conv CM -> 1 (keeps its bias; no BN after it).
    gate = s_ref[OFF["wf"]] * feats[0:N]
    for c in range(1, CM):
        gate = gate + s_ref[OFF["wf"] + c] * feats[c * N:(c + 1) * N]
    gate_ref[...] = gate + s_ref[OFF["bf"]]


# --------------------------------- wrapper -----------------------------------
@jax.jit
def spatial_gate_forward(x, p):
    eye_n = jnp.eye(N, dtype=jnp.float32)
    # Reduce0 weights, block-diagonal over batch so one MXU dot produces the
    # channel-major folded layout: W0[(o,n), (n',c)] = w0[o,c] * delta(n,n').
    w0_big = jnp.einsum("oc,nm->onmc", p["w0"], eye_n).reshape(R, N * C)
    wd_bigs = []
    for s in range(DILATION_CONV_NUM):
        w_oct = p[f"wd{s}"].reshape(CM, CM, 9)
        # Wd[(o,n), (t,c,n')] = w[o,c,t] * delta(n,n')  -- matches im2col row order.
        wd_bigs.append(jnp.einsum("oct,nm->ontcm", w_oct, eye_n).reshape(R, 9 * R))
    scalars = jnp.concatenate(
        [p["g0"], p["be0"]]
        + sum([[p[f"gd{s}"], p[f"bed{s}"]] for s in range(DILATION_CONV_NUM)], [])
        + [p["wf"], p["bf"]]
    ).astype(jnp.float32)

    n_flops = 2 * N * HW * (CM * C + DILATION_CONV_NUM * CM * CM * 9 + CM)
    n_bytes = 4 * (N * C * HW + N * HW + R * N * C + DILATION_CONV_NUM * R * 9 * R + S_TOTAL)

    gate = pl.pallas_call(
        spatial_gate_kernel,
        out_shape=jax.ShapeDtypeStruct((N, HW), jnp.float32),
        in_specs=[
            pl.BlockSpec(memory_space=pltpu.MemorySpace.VMEM),   # x (N*C, HW), free NCHW view
            pl.BlockSpec(memory_space=pltpu.MemorySpace.VMEM),   # reduce0 weights
            pl.BlockSpec(memory_space=pltpu.MemorySpace.VMEM),   # dilated stage 0 weights
            pl.BlockSpec(memory_space=pltpu.MemorySpace.VMEM),   # dilated stage 1 weights
            pl.BlockSpec(memory_space=pltpu.MemorySpace.SMEM),   # BN / final-conv scalars
        ],
        out_specs=pl.BlockSpec(memory_space=pltpu.MemorySpace.VMEM),
        cost_estimate=pl.CostEstimate(
            flops=int(n_flops),
            transcendentals=int(CM * (1 + DILATION_CONV_NUM)),
            bytes_accessed=int(n_bytes)),
    )(x.reshape(N * C, HW), w0_big, wd_bigs[0], wd_bigs[1], scalars)

    # expand_as(x): kept in the wrapper to preserve module semantics; XLA fuses the
    # broadcast into the consumer so the kernel never writes the 32x-redundant slab.
    return jnp.broadcast_to(gate.reshape(N, 1, H, W), (N, C, H, W))


# ------------------------------ parameter init -------------------------------
def make_params(key):
    ks = iter(jax.random.split(key, 32))
    p = {}
    p["w0"] = 0.1 * jax.random.normal(next(ks), (CM, C), jnp.float32)
    p["b0"] = 0.1 * jax.random.normal(next(ks), (CM,), jnp.float32)
    p["g0"] = 1.0 + 0.1 * jax.random.normal(next(ks), (CM,), jnp.float32)
    p["be0"] = 0.1 * jax.random.normal(next(ks), (CM,), jnp.float32)
    for s in range(DILATION_CONV_NUM):
        p[f"wd{s}"] = 0.1 * jax.random.normal(next(ks), (CM, CM, 3, 3), jnp.float32)
        p[f"bd{s}"] = 0.1 * jax.random.normal(next(ks), (CM,), jnp.float32)
        p[f"gd{s}"] = 1.0 + 0.1 * jax.random.normal(next(ks), (CM,), jnp.float32)
        p[f"bed{s}"] = 0.1 * jax.random.normal(next(ks), (CM,), jnp.float32)
    p["wf"] = 0.1 * jax.random.normal(next(ks), (CM,), jnp.float32)
    p["bf"] = 0.1 * jax.random.normal(next(ks), (1,), jnp.float32)
    return p


# --------------------------- pure-JAX reference ------------------------------
# Training-mode BatchNorm (batch statistics), like torch BatchNorm2d in .train().
# TODO(synk): eval-mode (running-stats) BN is not covered; bias-folding in the
# kernel is only valid for training-mode BN.
def ref_forward(x, p):
    def conv1x1(x, w, b):
        return jnp.einsum("oi,nihw->nohw", w, x) + b[None, :, None, None]

    def bn_train(x, g, be):
        mean = x.mean(axis=(0, 2, 3), keepdims=True)
        var = x.var(axis=(0, 2, 3), keepdims=True)   # biased, like torch training BN
        y = (x - mean) / jnp.sqrt(var + EPS)
        return y * g[None, :, None, None] + be[None, :, None, None]

    def dconv(x, w, b):
        y = jax.lax.conv_general_dilated(
            x, w, window_strides=(1, 1),
            padding=((DILATION_VAL, DILATION_VAL), (DILATION_VAL, DILATION_VAL)),
            rhs_dilation=(DILATION_VAL, DILATION_VAL),
            dimension_numbers=("NCHW", "OIHW", "NCHW"))
        return y + b[None, :, None, None]

    h = jax.nn.relu(bn_train(conv1x1(x, p["w0"], p["b0"]), p["g0"], p["be0"]))
    for s in range(DILATION_CONV_NUM):
        h = jax.nn.relu(bn_train(dconv(h, p[f"wd{s}"], p[f"bd{s}"]),
                                 p[f"gd{s}"], p[f"bed{s}"]))
    g = conv1x1(h, p["wf"][None, :], p["bf"])        # (N, 1, H, W)
    return jnp.broadcast_to(g, x.shape)              # expand_as(x)


# ---------------------------------- main --------------------------------------
if __name__ == "__main__":
    key = jax.random.PRNGKey(0)
    kx, kp = jax.random.split(key)
    x = jax.random.normal(kx, (N, C, H, W), jnp.float32)
    p = make_params(kp)

    out = jax.block_until_ready(spatial_gate_forward(x, p))
    ref = jax.block_until_ready(ref_forward(x, p))
    np.testing.assert_allclose(np.asarray(out), np.asarray(ref), rtol=1e-3, atol=1e-4)

    print("KERNEL_OK")
</pallas_src>

<mosaic_0001>
module attributes {stable_mosaic.version = 11 : i64} {
  func.func @spatial_gate_kernel(%arg0: memref<64x256xf32, #tpu.memory_space<vmem>>, %arg1: memref<4x64xf32, #tpu.memory_space<vmem>>, %arg2: memref<4x36xf32, #tpu.memory_space<vmem>>, %arg3: memref<4x36xf32, #tpu.memory_space<vmem>>, %arg4: memref<15xf32, #tpu.memory_space<smem>>, %arg5: memref<2x256xf32, #tpu.memory_space<vmem>>) attributes {dimension_semantics = [], scalar_prefetch = 0 : i64, scratch_operands = 0 : i64, tpu.core_type = #tpu.core_type<tc>} {
    %c0 = arith.constant 0 : index
    %c0_0 = arith.constant 0 : index
    %0 = vector.load %arg1[%c0, %c0_0] : memref<4x64xf32, #tpu.memory_space<vmem>>, vector<4x64xf32>
    %c0_1 = arith.constant 0 : index
    %c0_2 = arith.constant 0 : index
    %1 = vector.load %arg0[%c0_1, %c0_2] : memref<64x256xf32, #tpu.memory_space<vmem>>, vector<64x256xf32>
    %cst = arith.constant dense<0.000000e+00> : vector<4x256xf32>
    %2 = tpu.matmul %0, %1, %cst {dimension_numbers = #tpu.dot_dimension_numbers<[1], [0], [0], [1], [0, 0, 1, 1], [], []>} : vector<4x64xf32>, vector<64x256xf32>, vector<4x256xf32> -> vector<4x256xf32>
    %3 = vector.extract_strided_slice %2 {offsets = [0, 0], sizes = [2, 256], strides = [1, 1]} : vector<4x256xf32> to vector<2x256xf32>
    %4 = vector.shape_cast %3 : vector<2x256xf32> to vector<1x2x256xf32>
    %cst_3 = arith.constant dense<0.000000e+00> : vector<1xf32>
    %5 = vector.multi_reduction <add>, %4, %cst_3 [1, 2] : vector<1x2x256xf32> to vector<1xf32>
    %6 = vector.shape_cast %5 : vector<1xf32> to vector<1x1x1xf32>
    %7 = vector.extract %6[0, 0, 0] : f32 from vector<1x1x1xf32>
    %cst_4 = arith.constant 0.001953125 : f32
    %8 = arith.mulf %7, %cst_4 : f32
    %9 = vector.broadcast %8 : f32 to vector<2x256xf32>
    %10 = arith.subf %3, %9 : vector<2x256xf32>
    %11 = arith.mulf %10, %10 : vector<2x256xf32>
    %12 = vector.shape_cast %11 : vector<2x256xf32> to vector<1x2x256xf32>
    %cst_5 = arith.constant dense<0.000000e+00> : vector<1xf32>
    %13 = vector.multi_reduction <add>, %12, %cst_5 [1, 2] : vector<1x2x256xf32> to vector<1xf32>
    %14 = vector.shape_cast %13 : vector<1xf32> to vector<1x1x1xf32>
    %15 = vector.extract %14[0, 0, 0] : f32 from vector<1x1x1xf32>
    %cst_6 = arith.constant 0.001953125 : f32
    %16 = arith.mulf %15, %cst_6 : f32
    %c0_7 = arith.constant 0 : index
    %17 = memref.load %arg4[%c0_7] : memref<15xf32, #tpu.memory_space<smem>>
    %cst_8 = arith.constant 9.99999974E-6 : f32
    %18 = arith.addf %16, %cst_8 : f32
    %19 = math.rsqrt %18 : f32
    %20 = arith.mulf %17, %19 : f32
    %21 = vector.broadcast %20 : f32 to vector<2x256xf32>
    %22 = arith.mulf %10, %21 : vector<2x256xf32>
    %c2 = arith.constant 2 : index
    %23 = memref.load %arg4[%c2] : memref<15xf32, #tpu.memory_space<smem>>
    %24 = vector.broadcast %23 : f32 to vector<2x256xf32>
    %25 = arith.addf %22, %24 : vector<2x256xf32>
    %cst_9 = arith.constant 0.000000e+00 : f32
    %26 = vector.broadcast %cst_9 : f32 to vector<2x256xf32>
    %27 = arith.maximumf %25, %26 : vector<2x256xf32>
    %28 = vector.extract_strided_slice %2 {offsets = [2, 0], sizes = [2, 256], strides = [1, 1]} : vector<4x256xf32> to vector<2x256xf32>
    %29 = vector.shape_cast %28 : vector<2x256xf32> to vector<1x2x256xf32>
    %cst_10 = arith.constant dense<0.000000e+00> : vector<1xf32>
    %30 = vector.multi_reduction <add>, %29, %cst_10 [1, 2] : vector<1x2x256xf32> to vector<1xf32>
    %31 = vector.shape_cast %30 : vector<1xf32> to vector<1x1x1xf32>
    %32 = vector.extract %31[0, 0, 0] : f32 from vector<1x1x1xf32>
    %cst_11 = arith.constant 0.001953125 : f32
    %33 = arith.mulf %32, %cst_11 : f32
    %34 = vector.broadcast %33 : f32 to vector<2x256xf32>
    %35 = arith.subf %28, %34 : vector<2x256xf32>
    %36 = arith.mulf %35, %35 : vector<2x256xf32>
    %37 = vector.shape_cast %36 : vector<2x256xf32> to vector<1x2x256xf32>
    %cst_12 = arith.constant dense<0.000000e+00> : vector<1xf32>
    %38 = vector.multi_reduction <add>, %37, %cst_12 [1, 2] : vector<1x2x256xf32> to vector<1xf32>
    %39 = vector.shape_cast %38 : vector<1xf32> to vector<1x1x1xf32>
    %40 = vector.extract %39[0, 0, 0] : f32 from vector<1x1x1xf32>
    %cst_13 = arith.constant 0.001953125 : f32
    %41 = arith.mulf %40, %cst_13 : f32
    %c1 = arith.constant 1 : index
    %42 = memref.load %arg4[%c1] : memref<15xf32, #tpu.memory_space<smem>>
    %cst_14 = arith.constant 9.99999974E-6 : f32
    %43 = arith.addf %41, %cst_14 : f32
    %44 = math.rsqrt %43 : f32
    %45 = arith.mulf %42, %44 : f32
    %46 = vector.broadcast %45 : f32 to vector<2x256xf32>
    %47 = arith.mulf %35, %46 : vector<2x256xf32>
    %c3 = arith.constant 3 : index
    %48 = memref.load %arg4[%c3] : memref<15xf32, #tpu.memory_space<smem>>
    %49 = vector.broadcast %48 : f32 to vector<2x256xf32>
    %50 = arith.addf %47, %49 : vector<2x256xf32>
    %cst_15 = arith.constant 0.000000e+00 : f32
    %51 = vector.broadcast %cst_15 : f32 to vector<2x256xf32>
    %52 = arith.maximumf %50, %51 : vector<2x256xf32>
    %53 = tpu.concatenate %27, %52 in 0 : vector<2x256xf32>, vector<2x256xf32> -> vector<4x256xf32>
    %54 = tpu.iota {dimensions = array<i32: 1>} : vector<4x256xi32>
    %c4_i32 = arith.constant 4 : i32
    %55 = vector.broadcast %c4_i32 : i32 to vector<4x256xi32>
    %56 = arith.shrsi %54, %55 : vector<4x256xi32>
    %c15_i32 = arith.constant 15 : i32
    %57 = vector.broadcast %c15_i32 : i32 to vector<4x256xi32>
    %58 = arith.andi %54, %57 : vector<4x256xi32>
    %c4_i32_16 = arith.constant 4 : i32
    %59 = vector.broadcast %c4_i32_16 : i32 to vector<4x256xi32>
    %60 = arith.cmpi sge, %56, %59 : vector<4x256xi32>
    %c4_i32_17 = arith.constant 4 : i32
    %61 = vector.broadcast %c4_i32_17 : i32 to vector<4x256xi32>
    %62 = arith.cmpi sge, %58, %61 : vector<4x256xi32>
    %63 = arith.andi %60, %62 : vector<4x256xi1>
    %c4_i32_18 = arith.constant 4 : i32
    %64 = vector.broadcast %c4_i32_18 : i32 to vector<4x256xi32>
    %65 = arith.cmpi sge, %56, %64 : vector<4x256xi32>
    %c4_i32_19 = arith.constant 4 : i32
    %66 = vector.broadcast %c4_i32_19 : i32 to vector<4x256xi32>
    %67 = arith.cmpi sge, %56, %66 : vector<4x256xi32>
    %c12_i32 = arith.constant 12 : i32
    %68 = vector.broadcast %c12_i32 : i32 to vector<4x256xi32>
    %69 = arith.cmpi slt, %58, %68 : vector<4x256xi32>
    %70 = arith.andi %67, %69 : vector<4x256xi1>
    %c4_i32_20 = arith.constant 4 : i32
    %71 = vector.broadcast %c4_i32_20 : i32 to vector<4x256xi32>
    %72 = arith.cmpi sge, %58, %71 : vector<4x256xi32>
    %c12_i32_21 = arith.constant 12 : i32
    %73 = vector.broadcast %c12_i32_21 : i32 to vector<4x256xi32>
    %74 = arith.cmpi slt, %58, %73 : vector<4x256xi32>
    %c12_i32_22 = arith.constant 12 : i32
    %75 = vector.broadcast %c12_i32_22 : i32 to vector<4x256xi32>
    %76 = arith.cmpi slt, %56, %75 : vector<4x256xi32>
    %c4_i32_23 = arith.constant 4 : i32
    %77 = vector.broadcast %c4_i32_23 : i32 to vector<4x256xi32>
    %78 = arith.cmpi sge, %58, %77 : vector<4x256xi32>
    %79 = arith.andi %76, %78 : vector<4x256xi1>
    %c12_i32_24 = arith.constant 12 : i32
    %80 = vector.broadcast %c12_i32_24 : i32 to vector<4x256xi32>
    %81 = arith.cmpi slt, %56, %80 : vector<4x256xi32>
    %c12_i32_25 = arith.constant 12 : i32
    %82 = vector.broadcast %c12_i32_25 : i32 to vector<4x256xi32>
    %83 = arith.cmpi slt, %56, %82 : vector<4x256xi32>
    %c12_i32_26 = arith.constant 12 : i32
    %84 = vector.broadcast %c12_i32_26 : i32 to vector<4x256xi32>
    %85 = arith.cmpi slt, %58, %84 : vector<4x256xi32>
    %86 = arith.andi %83, %85 : vector<4x256xi1>
    %c68_i32 = arith.constant 68 : i32
    %87 = tpu.dynamic_rotate %53 by %c68_i32 dim 1 : vector<4x256xf32>, i32 -> vector<4x256xf32>
    %cst_27 = arith.constant 0.000000e+00 : f32
    %88 = vector.broadcast %cst_27 : f32 to vector<4x256xf32>
    %89 = arith.select %63, %87, %88 : vector<4x256xi1>, vector<4x256xf32>
    %c64_i32 = arith.constant 64 : i32
    %90 = tpu.dynamic_rotate %53 by %c64_i32 dim 1 : vector<4x256xf32>, i32 -> vector<4x256xf32>
    %cst_28 = arith.constant 0.000000e+00 : f32
    %91 = vector.broadcast %cst_28 : f32 to vector<4x256xf32>
    %92 = arith.select %65, %90, %91 : vector<4x256xi1>, vector<4x256xf32>
    %c60_i32 = arith.constant 60 : i32
    %93 = tpu.dynamic_rotate %53 by %c60_i32 dim 1 : vector<4x256xf32>, i32 -> vector<4x256xf32>
    %cst_29 = arith.constant 0.000000e+00 : f32
    %94 = vector.broadcast %cst_29 : f32 to vector<4x256xf32>
    %95 = arith.select %70, %93, %94 : vector<4x256xi1>, vector<4x256xf32>
    %c4_i32_30 = arith.constant 4 : i32
    %96 = tpu.dynamic_rotate %53 by %c4_i32_30 dim 1 : vector<4x256xf32>, i32 -> vector<4x256xf32>
    %cst_31 = arith.constant 0.000000e+00 : f32
    %97 = vector.broadcast %cst_31 : f32 to vector<4x256xf32>
    %98 = arith.select %72, %96, %97 : vector<4x256xi1>, vector<4x256xf32>
    %c252_i32 = arith.constant 252 : i32
    %99 = tpu.dynamic_rotate %53 by %c252_i32 dim 1 : vector<4x256xf32>, i32 -> vector<4x256xf32>
    %cst_32 = arith.constant 0.000000e+00 : f32
    %100 = vector.broadcast %cst_32 : f32 to vector<4x256xf32>
    %101 = arith.select %74, %99, %100 : vector<4x256xi1>, vector<4x256xf32>
    %c196_i32 = arith.constant 196 : i32
    %102 = tpu.dynamic_rotate %53 by %c196_i32 dim 1 : vector<4x256xf32>, i32 -> vector<4x256xf32>
    %cst_33 = arith.constant 0.000000e+00 : f32
    %103 = vector.broadcast %cst_33 : f32 to vector<4x256xf32>
    %104 = arith.select %79, %102, %103 : vector<4x256xi1>, vector<4x256xf32>
    %c192_i32 = arith.constant 192 : i32
    %105 = tpu.dynamic_rotate %53 by %c192_i32 dim 1 : vector<4x256xf32>, i32 -> vector<4x256xf32>
    %cst_34 = arith.constant 0.000000e+00 : f32
    %106 = vector.broadcast %cst_34 : f32 to vector<4x256xf32>
    %107 = arith.select %81, %105, %106 : vector<4x256xi1>, vector<4x256xf32>
    %c188_i32 = arith.constant 188 : i32
    %108 = tpu.dynamic_rotate %53 by %c188_i32 dim 1 : vector<4x256xf32>, i32 -> vector<4x256xf32>
    %cst_35 = arith.constant 0.000000e+00 : f32
    %109 = vector.broadcast %cst_35 : f32 to vector<4x256xf32>
    %110 = arith.select %86, %108, %109 : vector<4x256xi1>, vector<4x256xf32>
    %111 = tpu.concatenate %89, %92, %95, %98, %53, %101, %104, %107, %110 in 0 : vector<4x256xf32>, vector<4x256xf32>, vector<4x256xf32>, vector<4x256xf32>, vector<4x256xf32>, vector<4x256xf32>, vector<4x256xf32>, vector<4x256xf32>, vector<4x256xf32> -> vector<36x256xf32>
    %c0_36 = arith.constant 0 : index
    %c0_37 = arith.constant 0 : index
    %112 = vector.load %arg2[%c0_36, %c0_37] : memref<4x36xf32, #tpu.memory_space<vmem>>, vector<4x36xf32>
    %cst_38 = arith.constant dense<0.000000e+00> : vector<4x256xf32>
    %113 = tpu.matmul %112, %111, %cst_38 {dimension_numbers = #tpu.dot_dimension_numbers<[1], [0], [0], [1], [0, 0, 1, 1], [], []>} : vector<4x36xf32>, vector<36x256xf32>, vector<4x256xf32> -> vector<4x256xf32>
    %114 = vector.extract_strided_slice %113 {offsets = [0, 0], sizes = [2, 256], strides = [1, 1]} : vector<4x256xf32> to vector<2x256xf32>
    %115 = vector.shape_cast %114 : vector<2x256xf32> to vector<1x2x256xf32>
    %cst_39 = arith.constant dense<0.000000e+00> : vector<1xf32>
    %116 = vector.multi_reduction <add>, %115, %cst_39 [1, 2] : vector<1x2x256xf32> to vector<1xf32>
    %117 = vector.shape_cast %116 : vector<1xf32> to vector<1x1x1xf32>
    %118 = vector.extract %117[0, 0, 0] : f32 from vector<1x1x1xf32>
    %cst_40 = arith.constant 0.001953125 : f32
    %119 = arith.mulf %118, %cst_40 : f32
    %120 = vector.broadcast %119 : f32 to vector<2x256xf32>
    %121 = arith.subf %114, %120 : vector<2x256xf32>
    %122 = arith.mulf %121, %121 : vector<2x256xf32>
    %123 = vector.shape_cast %122 : vector<2x256xf32> to vector<1x2x256xf32>
    %cst_41 = arith.constant dense<0.000000e+00> : vector<1xf32>
    %124 = vector.multi_reduction <add>, %123, %cst_41 [1, 2] : vector<1x2x256xf32> to vector<1xf32>
    %125 = vector.shape_cast %124 : vector<1xf32> to vector<1x1x1xf32>
    %126 = vector.extract %125[0, 0, 0] : f32 from vector<1x1x1xf32>
    %cst_42 = arith.constant 0.001953125 : f32
    %127 = arith.mulf %126, %cst_42 : f32
    %c4 = arith.constant 4 : index
    %128 = memref.load %arg4[%c4] : memref<15xf32, #tpu.memory_space<smem>>
    %cst_43 = arith.constant 9.99999974E-6 : f32
    %129 = arith.addf %127, %cst_43 : f32
    %130 = math.rsqrt %129 : f32
    %131 = arith.mulf %128, %130 : f32
    %132 = vector.broadcast %131 : f32 to vector<2x256xf32>
    %133 = arith.mulf %121, %132 : vector<2x256xf32>
    %c6 = arith.constant 6 : index
    %134 = memref.load %arg4[%c6] : memref<15xf32, #tpu.memory_space<smem>>
    %135 = vector.broadcast %134 : f32 to vector<2x256xf32>
    %136 = arith.addf %133, %135 : vector<2x256xf32>
    %cst_44 = arith.constant 0.000000e+00 : f32
    %137 = vector.broadcast %cst_44 : f32 to vector<2x256xf32>
    %138 = arith.maximumf %136, %137 : vector<2x256xf32>
    %139 = vector.extract_strided_slice %113 {offsets = [2, 0], sizes = [2, 256], strides = [1, 1]} : vector<4x256xf32> to vector<2x256xf32>
    %140 = vector.shape_cast %139 : vector<2x256xf32> to vector<1x2x256xf32>
    %cst_45 = arith.constant dense<0.000000e+00> : vector<1xf32>
    %141 = vector.multi_reduction <add>, %140, %cst_45 [1, 2] : vector<1x2x256xf32> to vector<1xf32>
    %142 = vector.shape_cast %141 : vector<1xf32> to vector<1x1x1xf32>
    %143 = vector.extract %142[0, 0, 0] : f32 from vector<1x1x1xf32>
    %cst_46 = arith.constant 0.001953125 : f32
    %144 = arith.mulf %143, %cst_46 : f32
    %145 = vector.broadcast %144 : f32 to vector<2x256xf32>
    %146 = arith.subf %139, %145 : vector<2x256xf32>
    %147 = arith.mulf %146, %146 : vector<2x256xf32>
    %148 = vector.shape_cast %147 : vector<2x256xf32> to vector<1x2x256xf32>
    %cst_47 = arith.constant dense<0.000000e+00> : vector<1xf32>
    %149 = vector.multi_reduction <add>, %148, %cst_47 [1, 2] : vector<1x2x256xf32> to vector<1xf32>
    %150 = vector.shape_cast %149 : vector<1xf32> to vector<1x1x1xf32>
    %151 = vector.extract %150[0, 0, 0] : f32 from vector<1x1x1xf32>
    %cst_48 = arith.constant 0.001953125 : f32
    %152 = arith.mulf %151, %cst_48 : f32
    %c5 = arith.constant 5 : index
    %153 = memref.load %arg4[%c5] : memref<15xf32, #tpu.memory_space<smem>>
    %cst_49 = arith.constant 9.99999974E-6 : f32
    %154 = arith.addf %152, %cst_49 : f32
    %155 = math.rsqrt %154 : f32
    %156 = arith.mulf %153, %155 : f32
    %157 = vector.broadcast %156 : f32 to vector<2x256xf32>
    %158 = arith.mulf %146, %157 : vector<2x256xf32>
    %c7 = arith.constant 7 : index
    %159 = memref.load %arg4[%c7] : memref<15xf32, #tpu.memory_space<smem>>
    %160 = vector.broadcast %159 : f32 to vector<2x256xf32>
    %161 = arith.addf %158, %160 : vector<2x256xf32>
    %cst_50 = arith.constant 0.000000e+00 : f32
    %162 = vector.broadcast %cst_50 : f32 to vector<2x256xf32>
    %163 = arith.maximumf %161, %162 : vector<2x256xf32>
    %164 = tpu.concatenate %138, %163 in 0 : vector<2x256xf32>, vector<2x256xf32> -> vector<4x256xf32>
    %c68_i32_51 = arith.constant 68 : i32
    %165 = tpu.dynamic_rotate %164 by %c68_i32_51 dim 1 : vector<4x256xf32>, i32 -> vector<4x256xf32>
    %cst_52 = arith.constant 0.000000e+00 : f32
    %166 = vector.broadcast %cst_52 : f32 to vector<4x256xf32>
    %167 = arith.select %63, %165, %166 : vector<4x256xi1>, vector<4x256xf32>
    %c64_i32_53 = arith.constant 64 : i32
    %168 = tpu.dynamic_rotate %164 by %c64_i32_53 dim 1 : vector<4x256xf32>, i32 -> vector<4x256xf32>
    %cst_54 = arith.constant 0.000000e+00 : f32
    %169 = vector.broadcast %cst_54 : f32 to vector<4x256xf32>
    %170 = arith.select %65, %168, %169 : vector<4x256xi1>, vector<4x256xf32>
    %c60_i32_55 = arith.constant 60 : i32
    %171 = tpu.dynamic_rotate %164 by %c60_i32_55 dim 1 : vector<4x256xf32>, i32 -> vector<4x256xf32>
    %cst_56 = arith.constant 0.000000e+00 : f32
    %172 = vector.broadcast %cst_56 : f32 to vector<4x256xf32>
    %173 = arith.select %70, %171, %172 : vector<4x256xi1>, vector<4x256xf32>
    %c4_i32_57 = arith.constant 4 : i32
    %174 = tpu.dynamic_rotate %164 by %c4_i32_57 dim 1 : vector<4x256xf32>, i32 -> vector<4x256xf32>
    %cst_58 = arith.constant 0.000000e+00 : f32
    %175 = vector.broadcast %cst_58 : f32 to vector<4x256xf32>
    %176 = arith.select %72, %174, %175 : vector<4x256xi1>, vector<4x256xf32>
    %c252_i32_59 = arith.constant 252 : i32
    %177 = tpu.dynamic_rotate %164 by %c252_i32_59 dim 1 : vector<4x256xf32>, i32 -> vector<4x256xf32>
    %cst_60 = arith.constant 0.000000e+00 : f32
    %178 = vector.broadcast %cst_60 : f32 to vector<4x256xf32>
    %179 = arith.select %74, %177, %178 : vector<4x256xi1>, vector<4x256xf32>
    %c196_i32_61 = arith.constant 196 : i32
    %180 = tpu.dynamic_rotate %164 by %c196_i32_61 dim 1 : vector<4x256xf32>, i32 -> vector<4x256xf32>
    %cst_62 = arith.constant 0.000000e+00 : f32
    %181 = vector.broadcast %cst_62 : f32 to vector<4x256xf32>
    %182 = arith.select %79, %180, %181 : vector<4x256xi1>, vector<4x256xf32>
    %c192_i32_63 = arith.constant 192 : i32
    %183 = tpu.dynamic_rotate %164 by %c192_i32_63 dim 1 : vector<4x256xf32>, i32 -> vector<4x256xf32>
    %cst_64 = arith.constant 0.000000e+00 : f32
    %184 = vector.broadcast %cst_64 : f32 to vector<4x256xf32>
    %185 = arith.select %81, %183, %184 : vector<4x256xi1>, vector<4x256xf32>
    %c188_i32_65 = arith.constant 188 : i32
    %186 = tpu.dynamic_rotate %164 by %c188_i32_65 dim 1 : vector<4x256xf32>, i32 -> vector<4x256xf32>
    %cst_66 = arith.constant 0.000000e+00 : f32
    %187 = vector.broadcast %cst_66 : f32 to vector<4x256xf32>
    %188 = arith.select %86, %186, %187 : vector<4x256xi1>, vector<4x256xf32>
    %189 = tpu.concatenate %167, %170, %173, %176, %164, %179, %182, %185, %188 in 0 : vector<4x256xf32>, vector<4x256xf32>, vector<4x256xf32>, vector<4x256xf32>, vector<4x256xf32>, vector<4x256xf32>, vector<4x256xf32>, vector<4x256xf32>, vector<4x256xf32> -> vector<36x256xf32>
    %c0_67 = arith.constant 0 : index
    %c0_68 = arith.constant 0 : index
    %190 = vector.load %arg3[%c0_67, %c0_68] : memref<4x36xf32, #tpu.memory_space<vmem>>, vector<4x36xf32>
    %cst_69 = arith.constant dense<0.000000e+00> : vector<4x256xf32>
    %191 = tpu.matmul %190, %189, %cst_69 {dimension_numbers = #tpu.dot_dimension_numbers<[1], [0], [0], [1], [0, 0, 1, 1], [], []>} : vector<4x36xf32>, vector<36x256xf32>, vector<4x256xf32> -> vector<4x256xf32>
    %192 = vector.extract_strided_slice %191 {offsets = [0, 0], sizes = [2, 256], strides = [1, 1]} : vector<4x256xf32> to vector<2x256xf32>
    %193 = vector.shape_cast %192 : vector<2x256xf32> to vector<1x2x256xf32>
    %cst_70 = arith.constant dense<0.000000e+00> : vector<1xf32>
    %194 = vector.multi_reduction <add>, %193, %cst_70 [1, 2] : vector<1x2x256xf32> to vector<1xf32>
    %195 = vector.shape_cast %194 : vector<1xf32> to vector<1x1x1xf32>
    %196 = vector.extract %195[0, 0, 0] : f32 from vector<1x1x1xf32>
    %cst_71 = arith.constant 0.001953125 : f32
    %197 = arith.mulf %196, %cst_71 : f32
    %198 = vector.broadcast %197 : f32 to vector<2x256xf32>
    %199 = arith.subf %192, %198 : vector<2x256xf32>
    %200 = arith.mulf %199, %199 : vector<2x256xf32>
    %201 = vector.shape_cast %200 : vector<2x256xf32> to vector<1x2x256xf32>
    %cst_72 = arith.constant dense<0.000000e+00> : vector<1xf32>
    %202 = vector.multi_reduction <add>, %201, %cst_72 [1, 2] : vector<1x2x256xf32> to vector<1xf32>
    %203 = vector.shape_cast %202 : vector<1xf32> to vector<1x1x1xf32>
    %204 = vector.extract %203[0, 0, 0] : f32 from vector<1x1x1xf32>
    %cst_73 = arith.constant 0.001953125 : f32
    %205 = arith.mulf %204, %cst_73 : f32
    %c8 = arith.constant 8 : index
    %206 = memref.load %arg4[%c8] : memref<15xf32, #tpu.memory_space<smem>>
    %cst_74 = arith.constant 9.99999974E-6 : f32
    %207 = arith.addf %205, %cst_74 : f32
    %208 = math.rsqrt %207 : f32
    %209 = arith.mulf %206, %208 : f32
    %210 = vector.broadcast %209 : f32 to vector<2x256xf32>
    %211 = arith.mulf %199, %210 : vector<2x256xf32>
    %c10 = arith.constant 10 : index
    %212 = memref.load %arg4[%c10] : memref<15xf32, #tpu.memory_space<smem>>
    %213 = vector.broadcast %212 : f32 to vector<2x256xf32>
    %214 = arith.addf %211, %213 : vector<2x256xf32>
    %cst_75 = arith.constant 0.000000e+00 : f32
    %215 = vector.broadcast %cst_75 : f32 to vector<2x256xf32>
    %216 = arith.maximumf %214, %215 : vector<2x256xf32>
    %217 = vector.extract_strided_slice %191 {offsets = [2, 0], sizes = [2, 256], strides = [1, 1]} : vector<4x256xf32> to vector<2x256xf32>
    %218 = vector.shape_cast %217 : vector<2x256xf32> to vector<1x2x256xf32>
    %cst_76 = arith.constant dense<0.000000e+00> : vector<1xf32>
    %219 = vector.multi_reduction <add>, %218, %cst_76 [1, 2] : vector<1x2x256xf32> to vector<1xf32>
    %220 = vector.shape_cast %219 : vector<1xf32> to vector<1x1x1xf32>
    %221 = vector.extract %220[0, 0, 0] : f32 from vector<1x1x1xf32>
    %cst_77 = arith.constant 0.001953125 : f32
    %222 = arith.mulf %221, %cst_77 : f32
    %223 = vector.broadcast %222 : f32 to vector<2x256xf32>
    %224 = arith.subf %217, %223 : vector<2x256xf32>
    %225 = arith.mulf %224, %224 : vector<2x256xf32>
    %226 = vector.shape_cast %225 : vector<2x256xf32> to vector<1x2x256xf32>
    %cst_78 = arith.constant dense<0.000000e+00> : vector<1xf32>
    %227 = vector.multi_reduction <add>, %226, %cst_78 [1, 2] : vector<1x2x256xf32> to vector<1xf32>
    %228 = vector.shape_cast %227 : vector<1xf32> to vector<1x1x1xf32>
    %229 = vector.extract %228[0, 0, 0] : f32 from vector<1x1x1xf32>
    %cst_79 = arith.constant 0.001953125 : f32
    %230 = arith.mulf %229, %cst_79 : f32
    %c9 = arith.constant 9 : index
    %231 = memref.load %arg4[%c9] : memref<15xf32, #tpu.memory_space<smem>>
    %cst_80 = arith.constant 9.99999974E-6 : f32
    %232 = arith.addf %230, %cst_80 : f32
    %233 = math.rsqrt %232 : f32
    %234 = arith.mulf %231, %233 : f32
    %235 = vector.broadcast %234 : f32 to vector<2x256xf32>
    %236 = arith.mulf %224, %235 : vector<2x256xf32>
    %c11 = arith.constant 11 : index
    %237 = memref.load %arg4[%c11] : memref<15xf32, #tpu.memory_space<smem>>
    %238 = vector.broadcast %237 : f32 to vector<2x256xf32>
    %239 = arith.addf %236, %238 : vector<2x256xf32>
    %cst_81 = arith.constant 0.000000e+00 : f32
    %240 = vector.broadcast %cst_81 : f32 to vector<2x256xf32>
    %241 = arith.maximumf %239, %240 : vector<2x256xf32>
    %242 = tpu.concatenate %216, %241 in 0 : vector<2x256xf32>, vector<2x256xf32> -> vector<4x256xf32>
    %c12 = arith.constant 12 : index
    %243 = memref.load %arg4[%c12] : memref<15xf32, #tpu.memory_space<smem>>
    %244 = vector.extract_strided_slice %242 {offsets = [0, 0], sizes = [2, 256], strides = [1, 1]} : vector<4x256xf32> to vector<2x256xf32>
    %245 = vector.broadcast %243 : f32 to vector<2x256xf32>
    %246 = arith.mulf %245, %244 : vector<2x256xf32>
    %c13 = arith.constant 13 : index
    %247 = memref.load %arg4[%c13] : memref<15xf32, #tpu.memory_space<smem>>
    %248 = vector.extract_strided_slice %242 {offsets = [2, 0], sizes = [2, 256], strides = [1, 1]} : vector<4x256xf32> to vector<2x256xf32>
    %249 = vector.broadcast %247 : f32 to vector<2x256xf32>
    %250 = arith.mulf %249, %248 : vector<2x256xf32>
    %251 = arith.addf %246, %250 : vector<2x256xf32>
    %c14 = arith.constant 14 : index
    %252 = memref.load %arg4[%c14] : memref<15xf32, #tpu.memory_space<smem>>
    %253 = vector.broadcast %252 : f32 to vector<2x256xf32>
    %254 = arith.addf %251, %253 : vector<2x256xf32>
    %c0_82 = arith.constant 0 : index
    %c0_83 = arith.constant 0 : index
    %255 = vector.load %arg5[%c0_82, %c0_83] : memref<2x256xf32, #tpu.memory_space<vmem>>, vector<2x256xf32>
    tpu.vector_store %arg5[%c0_82, %c0_83], %254 {strides = array<i32>} : memref<2x256xf32, #tpu.memory_space<vmem>>, vector<2x256xf32>,
    return
  }
}

</mosaic_0001>

<llo_original>
// kernel: spatial_gate_forward.1
$region0: #{spatial_gate_forward.1}
  #allocation0 [shape = 'u32[]', space=smem, size = 0x4, offset = 0x4, fixed_abs, tag = 'smem constant byte address 0x4 - core index']
  #allocation1 [shape = 'u32[72,128]{1,0:T(1,128)}', space=vmem, size = 0x9000, scoped, tag = 'internal scratch']
  %s0 = inlined_call_operand.vmem [shape: f32[64,256], index: 0, kind: input, shape index: {}]
  %s1 = inlined_call_operand.vmem [shape: f32[4,64], index: 1, kind: input, shape index: {}]
  %s2 = inlined_call_operand.vmem [shape: f32[4,36], index: 2, kind: input, shape index: {}]
  %s3 = inlined_call_operand.vmem [shape: f32[4,36], index: 3, kind: input, shape index: {}]
  %s4 = inlined_call_operand.vmem [shape: f32[15], index: 4, kind: input, shape index: {}]
  %s5 = inlined_call_operand.vmem [shape: f32[2,256], index: 5, kind: output, shape index: {}]
  %s6 = sld [smem:[#allocation0]]
  $region34: #{spatial_gate_forward.1} parent=0
    _
  %s8 = ssub.s32 1, %s6
  %s9 = scalar_select 0, %s8, %s6
  $region1: #{spatial_gate_forward.1} parent=0
    #allocation2 [shape = 'u8[512]{0}', space=smem, size = 0x200, scoped, tag = 'input window, operand 4, single buffered']
    #allocation3 [shape = 's32[1]{0}', space=sflag, size = 0x4, scoped, tag = 'scoped memory for spatial_gate_forward.1']
    %10 = vsyncpa [#allocation3], 0
    // Predicated region
    $region2: #{spatial_gate_forward.1} parent=1 // pred_check
      _
    $region3: #{spatial_gate_forward.1} parent=1 // pred_check_branch
      %12 = sbr.rel (0) target = $region5
    $region4: #{spatial_gate_forward.1} parent=1 // pred_region
      _
    $region5: #{spatial_gate_forward.1} parent=1 // pred_fallthru
      _
    // Predicated region
    $region6: #{spatial_gate_forward.1} parent=1 // pred_check
      _
    $region7: #{spatial_gate_forward.1} parent=1 // pred_check_branch
      %14 = sbr.rel (0) target = $region9
    $region8: #{spatial_gate_forward.1} parent=1 // pred_region
      _
    $region9: #{spatial_gate_forward.1} parent=1 // pred_fallthru
      _
    // Predicated region
    $region10: #{spatial_gate_forward.1} parent=1 // pred_check
      _
    $region11: #{spatial_gate_forward.1} parent=1 // pred_check_branch
      %16 = sbr.rel (0) target = $region13
    $region12: #{spatial_gate_forward.1} parent=1 // pred_region
      _
    $region13: #{spatial_gate_forward.1} parent=1 // pred_fallthru
      _
    // Predicated region
    $region14: #{spatial_gate_forward.1} parent=1 // pred_check
      _
    $region15: #{spatial_gate_forward.1} parent=1 // pred_check_branch
      %18 = sbr.rel (0) target = $region17
    $region16: #{spatial_gate_forward.1} parent=1 // pred_region
      _
    $region17: #{spatial_gate_forward.1} parent=1 // pred_fallthru
      _
    // Predicated region
    $region18: #{spatial_gate_forward.1} parent=1 // pred_check
      _
    $region19: #{spatial_gate_forward.1} parent=1 // pred_check_branch
      %20 = sbr.rel (0) target = $region21
    $region20: #{spatial_gate_forward.1} parent=1 // pred_region
      %22 = vsyncadd [#allocation3], 0
      %s24 = sshll.u32 %s4, 4
      %s25 = int_to_ptr.vmem [resolvable:$true] %s24
      %27 = dma.vmem_to_smem %s25, 16, [#allocation2], [#allocation3]
    $region21: #{spatial_gate_forward.1} parent=1 // pred_fallthru
      _
    // Predicated region
    $region22: #{spatial_gate_forward.1} parent=1 // pred_check
      _
    $region23: #{spatial_gate_forward.1} parent=1 // pred_check_branch
      %29 = sbr.rel (0) target = $region25
    $region24: #{spatial_gate_forward.1} parent=1 // pred_region
      %31 = dma.done [#allocation3], 16
    $region25: #{spatial_gate_forward.1} parent=1 // pred_fallthru
      _
    %32 = sfence
    %v33 = vld [vmem:[%s1] sm:$0xf]
    %v34 = vld [vmem:[%s0] sm:$0xff]
    %v35 = vld [vmem:[%s0 + $0x8] sm:$0xff]
    %v36 = vld [vmem:[%s0 + $0x10] sm:$0xff]
    %v37 = vld [vmem:[%s0 + $0x18] sm:$0xff]
    %v38 = vld [vmem:[%s0 + $0x20] sm:$0xff]
    %v39 = vld [vmem:[%s0 + $0x28] sm:$0xff]
    %v40 = vld [vmem:[%s0 + $0x30] sm:$0xff]
    %v41 = vld [vmem:[%s0 + $0x38] sm:$0xff]
    %v42 = vld [vmem:[%s0 + $0x40] sm:$0xff]
    %v43 = vld [vmem:[%s0 + $0x48] sm:$0xff]
    %v44 = vld [vmem:[%s0 + $0x50] sm:$0xff]
    %v45 = vld [vmem:[%s0 + $0x58] sm:$0xff]
    %v46 = vld [vmem:[%s0 + $0x60] sm:$0xff]
    %v47 = vld [vmem:[%s0 + $0x68] sm:$0xff]
    %v48 = vld [vmem:[%s0 + $0x70] sm:$0xff]
    %v49 = vld [vmem:[%s0 + $0x78] sm:$0xff]
    %vm50 = vcmask 523264
    %v52 = vsel %vm50, %v33, 0
    %54 = vmatpush.msra.mxu0 0.0
    %55 = vmatpush.msra.mxu0 0.0
    %56 = vmatpush.msra.mxu0 0.0
    %57 = vmatpush.msra.mxu0 0.0
    %58 = vmatpush.msra.mxu0 0.0
    %59 = vmatpush.msra.mxu0 0.0
    %60 = vmatpush.msra.mxu0 0.0
    %61 = vmatpush.msra.mxu0 0.0
    %62 = vmatpush.msra.mxu0 %v48
    %63 = vmatpush.msra.mxu0 %v46
    %64 = vmatpush.msra.mxu0 %v44
    %65 = vmatpush.msra.mxu0 %v42
    %66 = vmatpush.msra.mxu0 %v40
    %67 = vmatpush.msra.mxu0 %v38
    %68 = vmatpush.msra.mxu0 %v36
    %69 = vmatpush.msra.mxu0 %v34
    %70 = vmatmul.f32.gmra.mxu0 %v52
    %v71 = vpop.f32.mrf.mxu0
    %v72 = vadd.f32 0.0, %v71
    %73 = vdwg.mxu0
    %74 = vmatpush.msra.mxu0 0.0
    %75 = vmatpush.msra.mxu0 0.0
    %76 = vmatpush.msra.mxu0 0.0
    %77 = vmatpush.msra.mxu0 0.0
    %78 = vmatpush.msra.mxu0 0.0
    %79 = vmatpush.msra.mxu0 0.0
    %80 = vmatpush.msra.mxu0 0.0
    %81 = vmatpush.msra.mxu0 0.0
    %82 = vmatpush.msra.mxu0 %v49
    %83 = vmatpush.msra.mxu0 %v47
    %84 = vmatpush.msra.mxu0 %v45
    %85 = vmatpush.msra.mxu0 %v43
    %86 = vmatpush.msra.mxu0 %v41
    %87 = vmatpush.msra.mxu0 %v39
    %88 = vmatpush.msra.mxu0 %v37
    %89 = vmatpush.msra.mxu0 %v35
    %90 = vmatmul.f32.gmra.mxu0 %v52
    %v91 = vpop.f32.mrf.mxu0
    %v92 = vadd.f32 0.0, %v91
    %93 = vdwg.mxu0
    %vm94 = vcmask 1041408
    %v95 = vsel %vm94, %v72, 0.0
    %v96 = vsel %vm94, %v92, 0.0
    %v97 = vadd.f32 %v95, %v96
    %98 = vadd.xlane.f32.xlu0 %v97
    %v99 = vpop.xlane.xlu0 %98
    %v100 = vrot.slane %v99, 4
    %v101 = vadd.f32 %v99, %v100
    %v102 = vrot.slane %v101, 2
    %v103 = vadd.f32 %v101, %v102
    %v104 = vrot.slane %v103, 1
    %v105 = vadd.f32 %v103, %v104
    %s106 = vtos %v105
    %s107 = smul.f32 %s106, 0.001953125
    %v108 = vstv %s107
    %v109 = vsub.f32 %v72, %v108
    %v110 = vsub.f32 %v92, %v108
    %v111 = vmul.f32 %v109, %v109
    %v112 = vmul.f32 %v110, %v110
    %v113 = vsel %vm94, %v111, 0.0
    %v114 = vsel %vm94, %v112, 0.0
    %v115 = vadd.f32 %v113, %v114
    %116 = vadd.xlane.f32.xlu0 %v115
    %v117 = vpop.xlane.xlu0 %116
    %v118 = vrot.slane %v117, 4
    %v119 = vadd.f32 %v117, %v118
    %v120 = vrot.slane %v119, 2
    %v121 = vadd.f32 %v119, %v120
    %v122 = vrot.slane %v121, 1
    %v123 = vadd.f32 %v121, %v122
    %s124 = vtos %v123
    %s125 = smul.f32 %s124, 0.001953125
    %s126 = sld [smem:[#allocation2]]
    %s127 = sadd.f32 %s125, 1e-05
    %v128 = vstv %s127
    %v129 = vrsqrt.pop %v128
    %v130 = vmul.f32 %v129, %v128
    %v131 = vmul.f32 %v130, %v129
    %v132 = vmul.f32 0.5, %v131
    %v133 = vsub.f32 1.5, %v132
    %v134 = vmul.f32 %v129, %v133
    %vm135 = vweird.f32 %v128
    %vm136 = vweird.f32 %v129
    %vm137 = vmor %vm135, %vm136
    %v138 = vsel %vm137, %v129, %v134
    %s139 = vtos %v138
    %s140 = smul.f32 %s126, %s139
    %v141 = vstv %s140
    %v142 = vmul.f32 %v109, %v141
    %v143 = vmul.f32 %v110, %v141
    %s144 = sld [smem:[#allocation2 + $0x2]]
    %v145 = vstv %s144
    %v146 = vadd.f32 %v142, %v145
    %v147 = vadd.f32 %v143, %v145
    %v148 = vmax.f32 %v146, 0.0
    %v149 = vmax.f32 %v147, 0.0
    %v152 = vrot.slane %v72, 2
    %v153 = vrot.slane %v92, 2
    %v156 = vsel %vm94, %v152, 0.0
    %v157 = vsel %vm94, %v153, 0.0
    %v158 = vadd.f32 %v156, %v157
    %159 = vadd.xlane.f32.xlu0 %v158
    %v160 = vpop.xlane.xlu0 %159
    %v161 = vrot.slane %v160, 4
    %v162 = vadd.f32 %v160, %v161
    %v163 = vrot.slane %v162, 2
    %v164 = vadd.f32 %v162, %v163
    %v165 = vrot.slane %v164, 1
    %v166 = vadd.f32 %v164, %v165
    %s167 = vtos %v166
    %s168 = smul.f32 %s167, 0.001953125
    %v169 = vstv %s168
    %v170 = vsub.f32 %v72, %v169
    %v171 = vsub.f32 %v92, %v169
    %v172 = vmul.f32 %v170, %v170
    %v173 = vmul.f32 %v171, %v171
    %v176 = vrot.slane %v172, 2
    %v177 = vrot.slane %v173, 2
    %v180 = vsel %vm94, %v176, 0.0
    %v181 = vsel %vm94, %v177, 0.0
    %v182 = vadd.f32 %v180, %v181
    %183 = vadd.xlane.f32.xlu0 %v182
    %v184 = vpop.xlane.xlu0 %183
    %v185 = vrot.slane %v184, 4
    %v186 = vadd.f32 %v184, %v185
    %v187 = vrot.slane %v186, 2
    %v188 = vadd.f32 %v186, %v187
    %v189 = vrot.slane %v188, 1
    %v190 = vadd.f32 %v188, %v189
    %s191 = vtos %v190
    %s192 = smul.f32 %s191, 0.001953125
    %s193 = sld [smem:[#allocation2 + $0x1]]
    %s194 = sadd.f32 %s192, 1e-05
    %v195 = vstv %s194
    %v196 = vrsqrt.pop %v195
    %v197 = vmul.f32 %v196, %v195
    %v198 = vmul.f32 %v197, %v196
    %v199 = vmul.f32 0.5, %v198
    %v200 = vsub.f32 1.5, %v199
    %v201 = vmul.f32 %v196, %v200
    %vm202 = vweird.f32 %v195
    %vm203 = vweird.f32 %v196
    %vm204 = vmor %vm202, %vm203
    %v205 = vsel %vm204, %v196, %v201
    %s206 = vtos %v205
    %s207 = smul.f32 %s193, %s206
    %v208 = vstv %s207
    %v209 = vmul.f32 %v170, %v208
    %v210 = vmul.f32 %v171, %v208
    %s211 = sld [smem:[#allocation2 + $0x3]]
    %v212 = vstv %s211
    %v213 = vadd.f32 %v209, %v212
    %v214 = vadd.f32 %v210, %v212
    %v215 = vmax.f32 %v213, 0.0
    %v216 = vmax.f32 %v214, 0.0
    %v217 = vsel %vm94, %v148, %v215
    %v218 = vsel %vm94, %v149, %v216
    %v219 = vlaneseq
    %v220 = vand.u32 %v219, 127
    %v221 = vadd.s32 %v220, 128
    %v222 = vshra.s32 %v220, 4
    %v223 = vshra.s32 %v221, 4
    %v224 = vand.u32 %v220, 15
    %v225 = vand.u32 %v221, 15
    %vm226 = vcmp.ge.s32.totalorder %v222, 4
    %vm227 = vcmp.ge.s32.totalorder %v223, 4
    %vm228 = vcmp.ge.s32.totalorder %v224, 4
    %vm229 = vcmp.ge.s32.totalorder %v225, 4
    %vm230 = vmand %vm226, %vm228
    %vm231 = vmand %vm227, %vm229
    %vm232 = vcmp.lt.s32.totalorder %v224, 12
    %vm233 = vcmp.lt.s32.totalorder %v225, 12
    %vm234 = vmand %vm226, %vm232
    %vm235 = vmand %vm227, %vm233
    %vm236 = vcmp.lt.s32.totalorder %v222, 12
    %vm237 = vcmp.lt.s32.totalorder %v223, 12
    %vm238 = vmand %vm236, %vm228
    %vm239 = vmand %vm237, %vm229
    %vm240 = vmand %vm236, %vm232
    %vm241 = vmand %vm237, %vm233
    %242 = vrot.lane.b32.xlu0 %v217, 68
    %v243 = vpop.permute.xlu0 %242
    %244 = vrot.lane.b32.xlu0 %v218, 68
    %v245 = vpop.permute.xlu0 %244
    %vm246 = vcmp.lt.s32.totalorder %v220, 68
    %v247 = vsel %vm246, %v243, %v245
    %v248 = vsel %vm246, %v245, %v243
    %v249 = vsel %vm230, %v248, 0.0
    %v250 = vsel %vm231, %v247, 0.0
    %251 = vrot.lane.b32.xlu0 %v217, 64
    %v252 = vpop.permute.xlu0 %251
    %253 = vrot.lane.b32.xlu0 %v218, 64
    %v254 = vpop.permute.xlu0 %253
    %vm255 = vcmp.lt.s32.totalorder %v220, 64
    %v256 = vsel %vm255, %v252, %v254
    %v257 = vsel %vm255, %v254, %v252
    %v258 = vsel %vm226, %v257, 0.0
    %v259 = vsel %vm227, %v256, 0.0
    %260 = vrot.lane.b32.xlu0 %v217, 60
    %v261 = vpop.permute.xlu0 %260
    %262 = vrot.lane.b32.xlu0 %v218, 60
    %v263 = vpop.permute.xlu0 %262
    %vm264 = vcmp.lt.s32.totalorder %v220, 60
    %v265 = vsel %vm264, %v261, %v263
    %v266 = vsel %vm264, %v263, %v261
    %v267 = vsel %vm234, %v266, 0.0
    %v268 = vsel %vm235, %v265, 0.0
    %269 = vrot.lane.b32.xlu0 %v217, 4
    %v270 = vpop.permute.xlu0 %269
    %271 = vrot.lane.b32.xlu0 %v218, 4
    %v272 = vpop.permute.xlu0 %271
    %vm273 = vcmp.lt.s32.totalorder %v220, 4
    %v274 = vsel %vm273, %v270, %v272
    %v275 = vsel %vm273, %v272, %v270
    %v276 = vsel %vm228, %v275, 0.0
    %v277 = vsel %vm229, %v274, 0.0
    %278 = vrot.lane.b32.xlu0 %v217, 124
    %v279 = vpop.permute.xlu0 %278
    %280 = vrot.lane.b32.xlu0 %v218, 124
    %v281 = vpop.permute.xlu0 %280
    %vm282 = vcmp.lt.s32.totalorder %v220, 124
    %v283 = vsel %vm282, %v279, %v281
    %v284 = vsel %vm282, %v281, %v279
    %v285 = vsel %vm232, %v283, 0.0
    %v286 = vsel %vm233, %v284, 0.0
    %v287 = vsel %vm238, %v247, 0.0
    %v288 = vsel %vm239, %v248, 0.0
    %v289 = vsel %vm236, %v256, 0.0
    %v290 = vsel %vm237, %v257, 0.0
    %v291 = vsel %vm240, %v265, 0.0
    %v292 = vsel %vm241, %v266, 0.0
    %v295 = vrot.slane %v258, 4
    %v296 = vrot.slane %v259, 4
    %v301 = vrot.slane %v276, 4
    %v302 = vrot.slane %v277, 4
    %v307 = vrot.slane %v285, 4
    %v308 = vrot.slane %v286, 4
    %v313 = vrot.slane %v289, 4
    %v314 = vrot.slane %v290, 4
    %vm317 = vcmask 1043456
    %v318 = vsel %vm317, %v249, %v295
    %v319 = vsel %vm317, %v250, %v296
    %v320 = vsel %vm317, %v267, %v301
    %v321 = vsel %vm317, %v268, %v302
    %v322 = vsel %vm317, %v217, %v307
    %v323 = vsel %vm317, %v218, %v308
    %v324 = vsel %vm317, %v287, %v313
    %v325 = vsel %vm317, %v288, %v314
    %v326 = vld [vmem:[%s2] sm:$0xf]
    %vm327 = vcmask 293888
    %v329 = vsel %vm327, %v326, 0
    %v332 = vsel %vm317, %v291, 0
    %v335 = vsel %vm317, %v292, 0
    %337 = vmatpush.msra.mxu0 0.0
    %338 = vmatpush.msra.mxu0 0.0
    %339 = vmatpush.msra.mxu0 0.0
    %340 = vmatpush.msra.mxu0 0.0
    %341 = vmatpush.msra.mxu0 0.0
    %342 = vmatpush.msra.mxu0 0.0
    %343 = vmatpush.msra.mxu0 0.0
    %344 = vmatpush.msra.mxu0 0.0
    %345 = vmatpush.msra.mxu0 0.0
    %346 = vmatpush.msra.mxu0 0.0
    %347 = vmatpush.msra.mxu0 0.0
    %348 = vmatpush.msra.mxu0 %v332
    %349 = vmatpush.msra.mxu0 %v324
    %350 = vmatpush.msra.mxu0 %v322
    %351 = vmatpush.msra.mxu0 %v320
    %352 = vmatpush.msra.mxu0 %v318
    %353 = vmatmul.f32.gmra.mxu0 %v329
    %v354 = vpop.f32.mrf.mxu0
    %v355 = vadd.f32 0.0, %v354
    %356 = vdwg.mxu0
    %357 = vmatpush.msra.mxu0 0.0
    %358 = vmatpush.msra.mxu0 0.0
    %359 = vmatpush.msra.mxu0 0.0
    %360 = vmatpush.msra.mxu0 0.0
    %361 = vmatpush.msra.mxu0 0.0
    %362 = vmatpush.msra.mxu0 0.0
    %363 = vmatpush.msra.mxu0 0.0
    %364 = vmatpush.msra.mxu0 0.0
    %365 = vmatpush.msra.mxu0 0.0
    %366 = vmatpush.msra.mxu0 0.0
    %367 = vmatpush.msra.mxu0 0.0
    %368 = vmatpush.msra.mxu0 %v335
    %369 = vmatpush.msra.mxu0 %v325
    %370 = vmatpush.msra.mxu0 %v323
    %371 = vmatpush.msra.mxu0 %v321
    %372 = vmatpush.msra.mxu0 %v319
    %373 = vmatmul.f32.gmra.mxu0 %v329
    %v374 = vpop.f32.mrf.mxu0
    %v375 = vadd.f32 0.0, %v374
    %376 = vdwg.mxu0
    %v377 = vsel %vm94, %v355, 0.0
    %v378 = vsel %vm94, %v375, 0.0
    %v379 = vadd.f32 %v377, %v378
    %380 = vadd.xlane.f32.xlu0 %v379
    %v381 = vpop.xlane.xlu0 %380
    %v382 = vrot.slane %v381, 4
    %v383 = vadd.f32 %v381, %v382
    %v384 = vrot.slane %v383, 2
    %v385 = vadd.f32 %v383, %v384
    %v386 = vrot.slane %v385, 1
    %v387 = vadd.f32 %v385, %v386
    %s388 = vtos %v387
    %s389 = smul.f32 %s388, 0.001953125
    %v390 = vstv %s389
    %v391 = vsub.f32 %v355, %v390
    %v392 = vsub.f32 %v375, %v390
    %v393 = vmul.f32 %v391, %v391
    %v394 = vmul.f32 %v392, %v392
    %v395 = vsel %vm94, %v393, 0.0
    %v396 = vsel %vm94, %v394, 0.0
    %v397 = vadd.f32 %v395, %v396
    %398 = vadd.xlane.f32.xlu0 %v397
    %v399 = vpop.xlane.xlu0 %398
    %v400 = vrot.slane %v399, 4
    %v401 = vadd.f32 %v399, %v400
    %v402 = vrot.slane %v401, 2
    %v403 = vadd.f32 %v401, %v402
    %v404 = vrot.slane %v403, 1
    %v405 = vadd.f32 %v403, %v404
    %s406 = vtos %v405
    %s407 = smul.f32 %s406, 0.001953125
    %s408 = sld [smem:[#allocation2 + $0x4]]
    %s409 = sadd.f32 %s407, 1e-05
    %v410 = vstv %s409
    %v411 = vrsqrt.pop %v410
    %v412 = vmul.f32 %v411, %v410
    %v413 = vmul.f32 %v412, %v411
    %v414 = vmul.f32 0.5, %v413
    %v415 = vsub.f32 1.5, %v414
    %v416 = vmul.f32 %v411, %v415
    %vm417 = vweird.f32 %v410
    %vm418 = vweird.f32 %v411
    %vm419 = vmor %vm417, %vm418
    %v420 = vsel %vm419, %v411, %v416
    %s421 = vtos %v420
    %s422 = smul.f32 %s408, %s421
    %v423 = vstv %s422
    %v424 = vmul.f32 %v391, %v423
    %v425 = vmul.f32 %v392, %v423
    %s426 = sld [smem:[#allocation2 + $0x6]]
    %v427 = vstv %s426
    %v428 = vadd.f32 %v424, %v427
    %v429 = vadd.f32 %v425, %v427
    %v430 = vmax.f32 %v428, 0.0
    %v431 = vmax.f32 %v429, 0.0
    %v434 = vrot.slane %v355, 2
    %v435 = vrot.slane %v375, 2
    %v438 = vsel %vm94, %v434, 0.0
    %v439 = vsel %vm94, %v435, 0.0
    %v440 = vadd.f32 %v438, %v439
    %441 = vadd.xlane.f32.xlu0 %v440
    %v442 = vpop.xlane.xlu0 %441
    %v443 = vrot.slane %v442, 4
    %v444 = vadd.f32 %v442, %v443
    %v445 = vrot.slane %v444, 2
    %v446 = vadd.f32 %v444, %v445
    %v447 = vrot.slane %v446, 1
    %v448 = vadd.f32 %v446, %v447
    %s449 = vtos %v448
    %s450 = smul.f32 %s449, 0.001953125
    %v451 = vstv %s450
    %v452 = vsub.f32 %v355, %v451
    %v453 = vsub.f32 %v375, %v451
    %v454 = vmul.f32 %v452, %v452
    %v455 = vmul.f32 %v453, %v453
    %v458 = vrot.slane %v454, 2
    %v459 = vrot.slane %v455, 2
    %v462 = vsel %vm94, %v458, 0.0
    %v463 = vsel %vm94, %v459, 0.0
    %v464 = vadd.f32 %v462, %v463
    %465 = vadd.xlane.f32.xlu0 %v464
    %v466 = vpop.xlane.xlu0 %465
    %v467 = vrot.slane %v466, 4
    %v468 = vadd.f32 %v466, %v467
    %v469 = vrot.slane %v468, 2
    %v470 = vadd.f32 %v468, %v469
    %v471 = vrot.slane %v470, 1
    %v472 = vadd.f32 %v470, %v471
    %s473 = vtos %v472
    %s474 = smul.f32 %s473, 0.001953125
    %s475 = sld [smem:[#allocation2 + $0x5]]
    %s476 = sadd.f32 %s474, 1e-05
    %v477 = vstv %s476
    %v478 = vrsqrt.pop %v477
    %v479 = vmul.f32 %v478, %v477
    %v480 = vmul.f32 %v479, %v478
    %v481 = vmul.f32 0.5, %v480
    %v482 = vsub.f32 1.5, %v481
    %v483 = vmul.f32 %v478, %v482
    %vm484 = vweird.f32 %v477
    %vm485 = vweird.f32 %v478
    %vm486 = vmor %vm484, %vm485
    %v487 = vsel %vm486, %v478, %v483
    %s488 = vtos %v487
    %s489 = smul.f32 %s475, %s488
    %v490 = vstv %s489
    %v491 = vmul.f32 %v452, %v490
    %v492 = vmul.f32 %v453, %v490
    %s493 = sld [smem:[#allocation2 + $0x7]]
    %v494 = vstv %s493
    %v495 = vadd.f32 %v491, %v494
    %v496 = vadd.f32 %v492, %v494
    %v497 = vmax.f32 %v495, 0.0
    %v498 = vmax.f32 %v496, 0.0
    %v499 = vsel %vm94, %v430, %v497
    %v500 = vsel %vm94, %v431, %v498
    %501 = vrot.lane.b32.xlu0 %v499, 68
    %v502 = vpop.permute.xlu0 %501
    %503 = vrot.lane.b32.xlu0 %v500, 68
    %v504 = vpop.permute.xlu0 %503
    %v505 = vsel %vm246, %v502, %v504
    %v506 = vsel %vm246, %v504, %v502
    %v507 = vsel %vm230, %v506, 0.0
    %v508 = vsel %vm231, %v505, 0.0
    %509 = vrot.lane.b32.xlu0 %v499, 64
    %v510 = vpop.permute.xlu0 %509
    %511 = vrot.lane.b32.xlu0 %v500, 64
    %v512 = vpop.permute.xlu0 %511
    %v513 = vsel %vm255, %v510, %v512
    %v514 = vsel %vm255, %v512, %v510
    %v515 = vsel %vm226, %v514, 0.0
    %v516 = vsel %vm227, %v513, 0.0
    %517 = vrot.lane.b32.xlu0 %v499, 60
    %v518 = vpop.permute.xlu0 %517
    %519 = vrot.lane.b32.xlu0 %v500, 60
    %v520 = vpop.permute.xlu0 %519
    %v521 = vsel %vm264, %v518, %v520
    %v522 = vsel %vm264, %v520, %v518
    %v523 = vsel %vm234, %v522, 0.0
    %v524 = vsel %vm235, %v521, 0.0
    %525 = vrot.lane.b32.xlu0 %v499, 4
    %v526 = vpop.permute.xlu0 %525
    %527 = vrot.lane.b32.xlu0 %v500, 4
    %v528 = vpop.permute.xlu0 %527
    %v529 = vsel %vm273, %v526, %v528
    %v530 = vsel %vm273, %v528, %v526
    %v531 = vsel %vm228, %v530, 0.0
    %v532 = vsel %vm229, %v529, 0.0
    %533 = vrot.lane.b32.xlu0 %v499, 124
    %v534 = vpop.permute.xlu0 %533
    %535 = vrot.lane.b32.xlu0 %v500, 124
    %v536 = vpop.permute.xlu0 %535
    %v537 = vsel %vm282, %v534, %v536
    %v538 = vsel %vm282, %v536, %v534
    %v539 = vsel %vm232, %v537, 0.0
    %v540 = vsel %vm233, %v538, 0.0
    %v541 = vsel %vm238, %v505, 0.0
    %v542 = vsel %vm239, %v506, 0.0
    %v543 = vsel %vm236, %v513, 0.0
    %v544 = vsel %vm237, %v514, 0.0
    %v545 = vsel %vm240, %v521, 0.0
    %v546 = vsel %vm241, %v522, 0.0
    %v549 = vrot.slane %v515, 4
    %v550 = vrot.slane %v516, 4
    %v555 = vrot.slane %v531, 4
    %v556 = vrot.slane %v532, 4
    %v561 = vrot.slane %v539, 4
    %v562 = vrot.slane %v540, 4
    %v567 = vrot.slane %v543, 4
    %v568 = vrot.slane %v544, 4
    %v571 = vsel %vm317, %v507, %v549
    %v572 = vsel %vm317, %v508, %v550
    %v573 = vsel %vm317, %v523, %v555
    %v574 = vsel %vm317, %v524, %v556
    %v575 = vsel %vm317, %v499, %v561
    %v576 = vsel %vm317, %v500, %v562
    %v577 = vsel %vm317, %v541, %v567
    %v578 = vsel %vm317, %v542, %v568
    %v579 = vld [vmem:[%s3] sm:$0xf]
    %v581 = vsel %vm327, %v579, 0
    %v584 = vsel %vm317, %v545, 0
    %v587 = vsel %vm317, %v546, 0
    %589 = vmatpush.msra.mxu0 0.0
    %590 = vmatpush.msra.mxu0 0.0
    %591 = vmatpush.msra.mxu0 0.0
    %592 = vmatpush.msra.mxu0 0.0
    %593 = vmatpush.msra.mxu0 0.0
    %594 = vmatpush.msra.mxu0 0.0
    %595 = vmatpush.msra.mxu0 0.0
    %596 = vmatpush.msra.mxu0 0.0
    %597 = vmatpush.msra.mxu0 0.0
    %598 = vmatpush.msra.mxu0 0.0
    %599 = vmatpush.msra.mxu0 0.0
    %600 = vmatpush.msra.mxu0 %v584
    %601 = vmatpush.msra.mxu0 %v577
    %602 = vmatpush.msra.mxu0 %v575
    %603 = vmatpush.msra.mxu0 %v573
    %604 = vmatpush.msra.mxu0 %v571
    %605 = vmatmul.f32.gmra.mxu0 %v581
    %v606 = vpop.f32.mrf.mxu0
    %v607 = vadd.f32 0.0, %v606
    %608 = vdwg.mxu0
    %609 = vmatpush.msra.mxu0 0.0
    %610 = vmatpush.msra.mxu0 0.0
    %611 = vmatpush.msra.mxu0 0.0
    %612 = vmatpush.msra.mxu0 0.0
    %613 = vmatpush.msra.mxu0 0.0
    %614 = vmatpush.msra.mxu0 0.0
    %615 = vmatpush.msra.mxu0 0.0
    %616 = vmatpush.msra.mxu0 0.0
    %617 = vmatpush.msra.mxu0 0.0
    %618 = vmatpush.msra.mxu0 0.0
    %619 = vmatpush.msra.mxu0 0.0
    %620 = vmatpush.msra.mxu0 %v587
    %621 = vmatpush.msra.mxu0 %v578
    %622 = vmatpush.msra.mxu0 %v576
    %623 = vmatpush.msra.mxu0 %v574
    %624 = vmatpush.msra.mxu0 %v572
    %625 = vmatmul.f32.gmra.mxu0 %v581
    %v626 = vpop.f32.mrf.mxu0
    %v627 = vadd.f32 0.0, %v626
    %628 = vdwg.mxu0
    %v629 = vsel %vm94, %v607, 0.0
    %v630 = vsel %vm94, %v627, 0.0
    %v631 = vadd.f32 %v629, %v630
    %632 = vadd.xlane.f32.xlu0 %v631
    %v633 = vpop.xlane.xlu0 %632
    %v634 = vrot.slane %v633, 4
    %v635 = vadd.f32 %v633, %v634
    %v636 = vrot.slane %v635, 2
    %v637 = vadd.f32 %v635, %v636
    %v638 = vrot.slane %v637, 1
    %v639 = vadd.f32 %v637, %v638
    %s640 = vtos %v639
    %s641 = smul.f32 %s640, 0.001953125
    %v642 = vstv %s641
    %v643 = vsub.f32 %v607, %v642
    %v644 = vsub.f32 %v627, %v642
    %v645 = vmul.f32 %v643, %v643
    %v646 = vmul.f32 %v644, %v644
    %v647 = vsel %vm94, %v645, 0.0
    %v648 = vsel %vm94, %v646, 0.0
    %v649 = vadd.f32 %v647, %v648
    %650 = vadd.xlane.f32.xlu0 %v649
    %v651 = vpop.xlane.xlu0 %650
    %v652 = vrot.slane %v651, 4
    %v653 = vadd.f32 %v651, %v652
    %v654 = vrot.slane %v653, 2
    %v655 = vadd.f32 %v653, %v654
    %v656 = vrot.slane %v655, 1
    %v657 = vadd.f32 %v655, %v656
    %s658 = vtos %v657
    %s659 = smul.f32 %s658, 0.001953125
    %s660 = sld [smem:[#allocation2 + $0x8]]
    %s661 = sadd.f32 %s659, 1e-05
    %v662 = vstv %s661
    %v663 = vrsqrt.pop %v662
    %v664 = vmul.f32 %v663, %v662
    %v665 = vmul.f32 %v664, %v663
    %v666 = vmul.f32 0.5, %v665
    %v667 = vsub.f32 1.5, %v666
    %v668 = vmul.f32 %v663, %v667
    %vm669 = vweird.f32 %v662
    %vm670 = vweird.f32 %v663
    %vm671 = vmor %vm669, %vm670
    %v672 = vsel %vm671, %v663, %v668
    %s673 = vtos %v672
    %s674 = smul.f32 %s660, %s673
    %v675 = vstv %s674
    %v676 = vmul.f32 %v643, %v675
    %v677 = vmul.f32 %v644, %v675
    %s678 = sld [smem:[#allocation2 + $0xa]]
    %v679 = vstv %s678
    %v680 = vadd.f32 %v676, %v679
    %v681 = vadd.f32 %v677, %v679
    %v682 = vmax.f32 %v680, 0.0
    %v683 = vmax.f32 %v681, 0.0
    %v686 = vrot.slane %v607, 2
    %v687 = vrot.slane %v627, 2
    %v690 = vsel %vm94, %v686, 0.0
    %v691 = vsel %vm94, %v687, 0.0
    %v692 = vadd.f32 %v690, %v691
    %693 = vadd.xlane.f32.xlu0 %v692
    %v694 = vpop.xlane.xlu0 %693
    %v695 = vrot.slane %v694, 4
    %v696 = vadd.f32 %v694, %v695
    %v697 = vrot.slane %v696, 2
    %v698 = vadd.f32 %v696, %v697
    %v699 = vrot.slane %v698, 1
    %v700 = vadd.f32 %v698, %v699
    %s701 = vtos %v700
    %s702 = smul.f32 %s701, 0.001953125
    %v703 = vstv %s702
    %v704 = vsub.f32 %v607, %v703
    %v705 = vsub.f32 %v627, %v703
    %v706 = vmul.f32 %v704, %v704
    %v707 = vmul.f32 %v705, %v705
    %v710 = vrot.slane %v706, 2
    %v711 = vrot.slane %v707, 2
    %v714 = vsel %vm94, %v710, 0.0
    %v715 = vsel %vm94, %v711, 0.0
    %v716 = vadd.f32 %v714, %v715
    %717 = vadd.xlane.f32.xlu0 %v716
    %v718 = vpop.xlane.xlu0 %717
    %v719 = vrot.slane %v718, 4
    %v720 = vadd.f32 %v718, %v719
    %v721 = vrot.slane %v720, 2
    %v722 = vadd.f32 %v720, %v721
    %v723 = vrot.slane %v722, 1
    %v724 = vadd.f32 %v722, %v723
    %s725 = vtos %v724
    %s726 = smul.f32 %s725, 0.001953125
    %s727 = sld [smem:[#allocation2 + $0x9]]
    %s728 = sadd.f32 %s726, 1e-05
    %v729 = vstv %s728
    %v730 = vrsqrt.pop %v729
    %v731 = vmul.f32 %v730, %v729
    %v732 = vmul.f32 %v731, %v730
    %v733 = vmul.f32 0.5, %v732
    %v734 = vsub.f32 1.5, %v733
    %v735 = vmul.f32 %v730, %v734
    %vm736 = vweird.f32 %v729
    %vm737 = vweird.f32 %v730
    %vm738 = vmor %vm736, %vm737
    %v739 = vsel %vm738, %v730, %v735
    %s740 = vtos %v739
    %s741 = smul.f32 %s727, %s740
    %v742 = vstv %s741
    %v743 = vmul.f32 %v704, %v742
    %v744 = vmul.f32 %v705, %v742
    %s745 = sld [smem:[#allocation2 + $0xb]]
    %v746 = vstv %s745
    %v747 = vadd.f32 %v743, %v746
    %v748 = vadd.f32 %v744, %v746
    %v749 = vmax.f32 %v747, 0.0
    %v750 = vmax.f32 %v748, 0.0
    %v751 = vsel %vm94, %v682, %v749
    %v752 = vsel %vm94, %v683, %v750
    %s753 = sld [smem:[#allocation2 + $0xc]]
    %v754 = vstv %s753
    %v755 = vmul.f32 %v754, %v751
    %v756 = vmul.f32 %v754, %v752
    %s757 = sld [smem:[#allocation2 + $0xd]]
    %v758 = vstv %s757
    %v759 = vmul.f32 %v758, %v751
    %v760 = vmul.f32 %v758, %v752
    %v763 = vrot.slane %v759, 2
    %v764 = vrot.slane %v760, 2
    %v767 = vadd.f32 %v755, %v763
    %v768 = vadd.f32 %v756, %v764
    %s769 = sld [smem:[#allocation2 + $0xe]]
    %v770 = vstv %s769
    %v771 = vadd.f32 %v767, %v770
    %v772 = vadd.f32 %v768, %v770
    %v775 = vrot.slane %v772, 6
    %v776 = vsel %vm94, %v771, %v775
    %778 = vst [vmem:[%s5] sm:$0xf] %v776
    // Predicated region
    $region26: #{spatial_gate_forward.1} parent=1 // pred_check
      _
    $region27: #{spatial_gate_forward.1} parent=1 // pred_check_branch
      %780 = sbr.rel (0) target = $region29
    $region28: #{spatial_gate_forward.1} parent=1 // pred_region
      _
    $region29: #{spatial_gate_forward.1} parent=1 // pred_fallthru
      _
    // Predicated region
    $region30: #{spatial_gate_forward.1} parent=1 // pred_check
      _
    $region31: #{spatial_gate_forward.1} parent=1 // pred_check_branch
      %782 = sbr.rel (0) target = $region33
    $region32: #{spatial_gate_forward.1} parent=1 // pred_region
      _
    $region33: #{spatial_gate_forward.1} parent=1 // pred_fallthru
      _
    %783 = vsyncpa [#allocation3], 1

</llo_original>
